<compile_context>
chip_gen: v5e
topology: v5e:2x2
jax: 0.10.0
libtpu: 0.0.40
codegen_flags: <defaults>
</compile_context>

<pallas_src>
import functools

import jax
import jax.numpy as jnp
from jax import lax
from jax.experimental import pallas as pl
from jax.experimental.pallas import tpu as pltpu


def _cdiv(a, b):
    return -(-a // b)


def _round_up(n, m):
    return ((n + m - 1) // m) * m


def _num_tensorcores():
    # Use the 2-TensorCore megacore split only where it exists (v7x, v4, v5p);
    # on single-TC chips (v5e/v6e) a size-2 "parallel" axis is just serial waste.
    try:
        kind = jax.devices()[0].device_kind.lower()
    except Exception:
        return 1
    return 2 if any(t in kind for t in ("v7", "7x", "v4", "v5p")) else 1


# ----------------------------------------------------------------------------
# Fused one-pass moments kernel on lane-packed rows.
#   x_ref     : (tile, W) packed samples (W = R*D <= 128, lane-dense)
#   shift_ref : (1, W) packed shift row (x[0] tiled R times)
# Accumulates per-core:
#   sum_ref : (1, W)  shifted column sums
#   xtx_ref : (W, W)  shifted Gram matrix (MXU, full-width output)
# ----------------------------------------------------------------------------
def _fused_stats_kernel(shift_ref, x_ref, sum_ref, xtx_ref, *,
                        tile, tiles_per_core, tp, exact, is_bf16):
    c = pl.program_id(0)   # parallel core-split axis
    i = pl.program_id(1)   # arbitrary reduction axis (outputs stay resident)

    @pl.when(i == 0)
    def _():
        sum_ref[...] = jnp.zeros_like(sum_ref)
        xtx_ref[...] = jnp.zeros_like(xtx_ref)

    if is_bf16:
        # keep bf16 MXU operands; accumulation is f32 via preferred_element_type
        xs = x_ref[...] - shift_ref[...]
    else:
        xs = x_ref[...].astype(jnp.float32) - shift_ref[...].astype(jnp.float32)

    def accum(vals):
        sum_ref[...] += jnp.sum(vals.astype(jnp.float32), axis=0, keepdims=True)
        xtx_ref[...] += lax.dot_general(        # (W, W) Gram, full MXU output tile
            vals, vals,
            dimension_numbers=(((0,), (0,)), ((), ())),
            preferred_element_type=jnp.float32,
        )

    if exact:
        # grid * tile exactly covers the packed rows: no masking anywhere.
        accum(xs)
    else:
        row0 = (c * tiles_per_core + i) * tile
        # Fast path: fully-valid block, no mask ops.
        @pl.when(row0 + tile <= tp)
        def _():
            accum(xs)

        # Ragged tail block: mask unspecified (past-the-end) rows to zero
        # BEFORE the sum / dot (ordering is what makes reading padding safe).
        @pl.when(jnp.logical_and(row0 < tp, row0 + tile > tp))
        def _():
            rows = row0 + lax.broadcasted_iota(jnp.int32, (tile, 1), 0)
            accum(jnp.where(rows < tp, xs, jnp.zeros_like(xs)))
        # row0 >= tp: clamped duplicate block -> skip compute entirely.


def _pca_moments(x):
    """Single streaming pass over x = (T, D).

    Returns (shift, s, xtx) with shift = x[0] (f32),
    s = Σ_t (x_t - shift)  (D,),  xtx = Σ_t (x_t - shift)(x_t - shift)^T  (D, D).
    """
    T, D = x.shape
    shift_row = x[:1]                                # (1, D), native dtype
    shift = shift_row[0].astype(jnp.float32)         # (D,)

    # Lane packing: R original rows per packed row -> W = R*D lanes (<= 128).
    R = max(1, 128 // D)
    W = R * D
    Tp = T // R
    r = T - Tp * R                                   # leftover rows (< R)

    s = jnp.zeros((D,), jnp.float32)
    xtx = jnp.zeros((D, D), jnp.float32)

    if Tp > 0:
        # Row-major (Tp*R, D) -> (Tp, R*D) is a layout-preserving reshape.
        x_main = x[: Tp * R].reshape(Tp, W)
        shift_packed = jnp.tile(shift_row, (1, R))   # (1, W)

        itemsize = x.dtype.itemsize
        sub = max(8, 32 // itemsize)                 # sublane multiple per dtype
        lane_w = _round_up(W, 128)                   # padded lane width in VMEM
        bytes_per_row = lane_w * itemsize
        budget = 8 * 1024 * 1024                     # per-buffer block budget
        max_rows = max(sub, (budget // bytes_per_row) // sub * sub)

        ncores = _num_tensorcores()
        rows_per_core = _cdiv(Tp, ncores)
        tile = min(max_rows, _round_up(rows_per_core, sub))
        n_blocks = _cdiv(Tp, tile)
        ncores = min(ncores, n_blocks)
        tiles_per_core = _cdiv(n_blocks, ncores)
        exact = (ncores * tiles_per_core == n_blocks) and (Tp % tile == 0)
        max_blk = n_blocks - 1

        def x_map(c, i):
            # Clamp out-of-range blocks back in bounds (their compute is skipped
            # in-kernel; clamping avoids an OOB DMA and re-uses the same block).
            return (jnp.minimum(c * tiles_per_core + i, max_blk), 0)

        kernel = functools.partial(
            _fused_stats_kernel,
            tile=tile, tiles_per_core=tiles_per_core, tp=Tp,
            exact=exact, is_bf16=(x.dtype == jnp.bfloat16),
        )

        cost = pl.CostEstimate(
            flops=2 * Tp * W * W + Tp * W,
            transcendentals=0,
            bytes_accessed=Tp * W * itemsize + ncores * (W * W + W) * 4 + W * itemsize,
        )

        part_sum, part_xtx = pl.pallas_call(
            kernel,
            out_shape=(
                jax.ShapeDtypeStruct((ncores, 1, W), jnp.float32),
                jax.ShapeDtypeStruct((ncores, W, W), jnp.float32),
            ),
            grid_spec=pltpu.PrefetchScalarGridSpec(
                num_scalar_prefetch=0,
                grid=(ncores, tiles_per_core),
                in_specs=[
                    pl.BlockSpec((1, W), lambda c, i: (0, 0)),   # packed shift (resident)
                    pl.BlockSpec((tile, W), x_map),              # streamed, lane-dense
                ],
                out_specs=[
                    pl.BlockSpec((None, 1, W), lambda c, i: (c, 0, 0)),
                    pl.BlockSpec((None, W, W), lambda c, i: (c, 0, 0)),
                ],
            ),
            compiler_params=pltpu.CompilerParams(
                dimension_semantics=("parallel", "arbitrary"),
                vmem_limit_bytes=32 * 1024 * 1024,
            ),
            cost_estimate=cost,
        )(shift_packed, x_main)

        s_packed = jnp.sum(part_sum, axis=0)[0]       # (W,) combine per-core partials
        G = jnp.sum(part_xtx, axis=0)                  # (W, W)
        # Fold packing: column sums of the R sub-blocks, sum of diagonal DxD blocks.
        s = s_packed.reshape(R, D).sum(axis=0)
        xtx = jnp.einsum("iaib->ab", G.reshape(R, D, R, D))

    if r > 0:
        # Fewer than R leftover rows: fold them in plain JAX (negligible work).
        xt = x[Tp * R:].astype(jnp.float32) - shift[None, :]
        s = s + xt.sum(axis=0)
        xtx = xtx + xt.T @ xt

    return shift, s, xtx


# ----------------------------------------------------------------------------
# Module wrapper (mirrors diffsptk.PrincipalComponentAnalysis)
# ----------------------------------------------------------------------------
class PrincipalComponentAnalysis:
    def __init__(self, order, n_comp, cov_type="sample", sort="descending"):
        assert 0 <= order
        assert 1 <= n_comp <= order + 1
        assert sort in ("ascending", "descending")
        assert cov_type in ("sample", "unbiased", "correlation", 0, 1, 2)
        self.order = order
        self.n_comp = n_comp
        self.cov_type = cov_type
        self.sort = sort
        # deterministic buffer init (same as register_buffer in the torch module)
        self.v = jnp.eye(order + 1, n_comp, dtype=jnp.float32)
        self.m = jnp.zeros(order + 1, dtype=jnp.float32)

    def __call__(self, x):
        D = self.order + 1
        assert x.shape[-1] == D, "dimension of input is wrong"
        x = x.reshape(-1, D)           # native dtype; kernel handles upcast/packing
        T = x.shape[0]
        assert self.n_comp + 1 <= T, "Number of data samples is too small"

        # --- single streaming pass: shifted sum + shifted scatter (Pallas) ---
        shift, s, xtx = _pca_moments(x)
        Tf = jnp.float32(T)
        m = shift + s / Tf                                  # mean vector
        scatter = xtx - jnp.outer(s, s) / Tf                # Σ (x_t - m)(x_t - m)^T

        if self.cov_type in (0, "sample"):
            cov = scatter / Tf
        elif self.cov_type in (1, "unbiased"):
            cov = scatter / jnp.float32(T - 1)
        else:  # correlation (torch.corrcoef): the T-1 normalization cancels
            c = scatter / jnp.float32(T - 1)
            d = jnp.sqrt(jnp.diag(c))
            cov = jnp.clip(c / jnp.outer(d, d), -1.0, 1.0)

        # TODO(synk): torch.linalg.eigh has no Pallas equivalent; tiny (D, D)
        # symmetric eigendecomposition done in plain JAX.
        e, v = jnp.linalg.eigh(cov)          # ascending eigenvalues
        e = e[-self.n_comp:]
        v = v[:, -self.n_comp:]
        if self.sort == "descending":
            e = e[::-1]
            v = v[:, ::-1]

        self.v = v
        self.m = m
        return e, self.v, self.m

    def transform(self, x):
        # small matmul; kept as plain-JAX glue
        v = self.v[:, ::-1] if self.sort == "ascending" else self.v
        return jnp.matmul(x - self.m, v)


if __name__ == "__main__":
    key = jax.random.PRNGKey(0)
    order, n_comp = 7, 4
    # x: (..., M+1) = (4, 32, 8) -> flattened to (T=128, D=8) inside forward
    x = jax.random.normal(key, (4, 32, order + 1), dtype=jnp.float32)

    pca = PrincipalComponentAnalysis(order, n_comp, cov_type="sample",
                                     sort="descending")
    e, v, m = pca(x)
    jax.block_until_ready((e, v, m))

    # sanity check against a plain-JAX reference
    xf = x.reshape(-1, order + 1)
    cov_ref = jnp.cov(xf.T, bias=True)
    e_ref = jnp.linalg.eigh(cov_ref)[0][-n_comp:][::-1]
    m_ref = xf.mean(axis=0)
    assert jnp.allclose(e, e_ref, rtol=1e-3, atol=1e-4)
    assert jnp.allclose(m, m_ref, rtol=1e-3, atol=1e-5)
    assert e.shape == (n_comp,)
    assert v.shape == (order + 1, n_comp)
    assert m.shape == (order + 1,)

    y = pca.transform(x)
    jax.block_until_ready(y)
    assert y.shape == (4, 32, n_comp)

    # second case: ragged T = 25 (exercises in-kernel tail masking + JAX tail fold)
    x2 = jax.random.normal(jax.random.PRNGKey(1), (25, order + 1),
                           dtype=jnp.float32) * 0.5 + 1.0
    pca2 = PrincipalComponentAnalysis(order, 3, cov_type="unbiased")
    e2, v2, m2 = pca2(x2)
    jax.block_until_ready((e2, v2, m2))
    cov2_ref = jnp.cov(x2.T)
    e2_ref = jnp.linalg.eigh(cov2_ref)[0][-3:][::-1]
    assert jnp.allclose(e2, e2_ref, rtol=1e-3, atol=1e-4)
    assert jnp.allclose(m2, x2.mean(axis=0), rtol=1e-3, atol=1e-5)

    print("KERNEL_OK")
</pallas_src>

<mosaic_0001>
module attributes {stable_mosaic.version = 11 : i64} {
  func.func @_fused_stats_kernel(%arg0: i32, %arg1: i32, %arg2: memref<1x128xf32, #tpu.memory_space<vmem>>, %arg3: memref<8x128xf32, #tpu.memory_space<vmem>>, %arg4: memref<1x1x128xf32, #tpu.memory_space<vmem>>, %arg5: memref<1x128x128xf32, #tpu.memory_space<vmem>>) attributes {dimension_semantics = [#tpu.dimension_semantics<parallel>, #tpu.dimension_semantics<arbitrary>], iteration_bounds = array<i64: 1, 1>, scalar_prefetch = 0 : i64, scratch_operands = 0 : i64, tpu.core_type = #tpu.core_type<tc>, window_params = [{pipeline_mode = #tpu.pipeline_mode<synchronous>, transform_indices = @transform_0, window_bounds = array<i64: 1, 128>}, {transform_indices = @transform_1, window_bounds = array<i64: 8, 128>}, {transform_indices = @transform_2, window_bounds = array<i64: 1, 1, 128>}, {transform_indices = @transform_3, window_bounds = array<i64: 1, 128, 128>}]} {
    %c0_i32 = arith.constant 0 : i32
    %0 = arith.cmpi eq, %arg1, %c0_i32 : i32
    %1 = arith.extui %0 : i1 to i32
    %c0_i32_0 = arith.constant 0 : i32
    %2 = arith.cmpi ne, %1, %c0_i32_0 : i32
    scf.if %2 {
      %cst_17 = arith.constant 0.000000e+00 : f32
      %22 = vector.broadcast %cst_17 : f32 to vector<1x128xf32>
      %c0_18 = arith.constant 0 : index
      %c0_19 = arith.constant 0 : index
      %c0_20 = arith.constant 0 : index
      %23 = vector.load %arg4[%c0_18, %c0_19, %c0_20] : memref<1x1x128xf32, #tpu.memory_space<vmem>>, vector<1x1x128xf32>
      %24 = vector.shape_cast %23 : vector<1x1x128xf32> to vector<1x128xf32>
      %25 = vector.shape_cast %22 : vector<1x128xf32> to vector<1x1x128xf32>
      tpu.vector_store %arg4[%c0_18, %c0_19, %c0_20], %25 {strides = array<i32>} : memref<1x1x128xf32, #tpu.memory_space<vmem>>, vector<1x1x128xf32>,
      %cst_21 = arith.constant 0.000000e+00 : f32
      %26 = vector.broadcast %cst_21 : f32 to vector<128x128xf32>
      %c0_22 = arith.constant 0 : index
      %c0_23 = arith.constant 0 : index
      %c0_24 = arith.constant 0 : index
      %27 = vector.load %arg5[%c0_22, %c0_23, %c0_24] : memref<1x128x128xf32, #tpu.memory_space<vmem>>, vector<1x128x128xf32>
      %28 = vector.shape_cast %27 : vector<1x128x128xf32> to vector<128x128xf32>
      %29 = vector.shape_cast %26 : vector<128x128xf32> to vector<1x128x128xf32>
      tpu.vector_store %arg5[%c0_22, %c0_23, %c0_24], %29 {strides = array<i32>} : memref<1x128x128xf32, #tpu.memory_space<vmem>>, vector<1x128x128xf32>,
    } else {
    }
    %c0 = arith.constant 0 : index
    %c0_1 = arith.constant 0 : index
    %3 = vector.load %arg3[%c0, %c0_1] : memref<8x128xf32, #tpu.memory_space<vmem>>, vector<8x128xf32>
    %c0_2 = arith.constant 0 : index
    %c0_3 = arith.constant 0 : index
    %4 = vector.load %arg2[%c0_2, %c0_3] : memref<1x128xf32, #tpu.memory_space<vmem>>, vector<1x128xf32>
    %5 = vector.broadcast %4 : vector<1x128xf32> to vector<8x128xf32>
    %6 = arith.subf %3, %5 : vector<8x128xf32>
    %c0_4 = arith.constant 0 : index
    %c0_5 = arith.constant 0 : index
    %c0_6 = arith.constant 0 : index
    %7 = vector.load %arg4[%c0_4, %c0_5, %c0_6] : memref<1x1x128xf32, #tpu.memory_space<vmem>>, vector<1x1x128xf32>
    %8 = vector.shape_cast %7 : vector<1x1x128xf32> to vector<1x128xf32>
    %cst = arith.constant dense<0.000000e+00> : vector<128xf32>
    %9 = vector.multi_reduction <add>, %6, %cst [0] : vector<8x128xf32> to vector<128xf32>
    %10 = vector.shape_cast %9 : vector<128xf32> to vector<1x128xf32>
    %11 = arith.addf %8, %10 : vector<1x128xf32>
    %c0_7 = arith.constant 0 : index
    %c0_8 = arith.constant 0 : index
    %c0_9 = arith.constant 0 : index
    %12 = vector.load %arg4[%c0_7, %c0_8, %c0_9] : memref<1x1x128xf32, #tpu.memory_space<vmem>>, vector<1x1x128xf32>
    %13 = vector.shape_cast %12 : vector<1x1x128xf32> to vector<1x128xf32>
    %14 = vector.shape_cast %11 : vector<1x128xf32> to vector<1x1x128xf32>
    tpu.vector_store %arg4[%c0_7, %c0_8, %c0_9], %14 {strides = array<i32>} : memref<1x1x128xf32, #tpu.memory_space<vmem>>, vector<1x1x128xf32>,
    %c0_10 = arith.constant 0 : index
    %c0_11 = arith.constant 0 : index
    %c0_12 = arith.constant 0 : index
    %15 = vector.load %arg5[%c0_10, %c0_11, %c0_12] : memref<1x128x128xf32, #tpu.memory_space<vmem>>, vector<1x128x128xf32>
    %16 = vector.shape_cast %15 : vector<1x128x128xf32> to vector<128x128xf32>
    %cst_13 = arith.constant dense<0.000000e+00> : vector<128x128xf32>
    %17 = tpu.matmul %6, %6, %cst_13 {dimension_numbers = #tpu.dot_dimension_numbers<[0], [0], [1], [1], [0, 1, 1, 1], [], []>} : vector<8x128xf32>, vector<8x128xf32>, vector<128x128xf32> -> vector<128x128xf32>
    %18 = arith.addf %16, %17 : vector<128x128xf32>
    %c0_14 = arith.constant 0 : index
    %c0_15 = arith.constant 0 : index
    %c0_16 = arith.constant 0 : index
    %19 = vector.load %arg5[%c0_14, %c0_15, %c0_16] : memref<1x128x128xf32, #tpu.memory_space<vmem>>, vector<1x128x128xf32>
    %20 = vector.shape_cast %19 : vector<1x128x128xf32> to vector<128x128xf32>
    %21 = vector.shape_cast %18 : vector<128x128xf32> to vector<1x128x128xf32>
    tpu.vector_store %arg5[%c0_14, %c0_15, %c0_16], %21 {strides = array<i32>} : memref<1x128x128xf32, #tpu.memory_space<vmem>>, vector<1x128x128xf32>,
    return
  }
  func.func @transform_0(%arg0: i32, %arg1: i32) -> (i32, i32) {
    %c0_i32 = arith.constant 0 : i32
    %c0_i32_0 = arith.constant 0 : i32
    %c0_i32_1 = arith.constant 0 : i32
    return %c0_i32, %c0_i32_0 : i32, i32
  }
  func.func @transform_1(%arg0: i32, %arg1: i32) -> (i32, i32) {
    %c1_i32 = arith.constant 1 : i32
    %0 = arith.muli %arg0, %c1_i32 : i32
    %1 = arith.addi %0, %arg1 : i32
    %c0_i32 = arith.constant 0 : i32
    %2 = arith.minsi %1, %c0_i32 : i32
    %c0_i32_0 = arith.constant 0 : i32
    %c0_i32_1 = arith.constant 0 : i32
    return %2, %c0_i32_0 : i32, i32
  }
  func.func @transform_2(%arg0: i32, %arg1: i32) -> (i32, i32, i32) {
    %c0_i32 = arith.constant 0 : i32
    %c0_i32_0 = arith.constant 0 : i32
    %c0_i32_1 = arith.constant 0 : i32
    return %arg0, %c0_i32, %c0_i32_0 : i32, i32, i32
  }
  func.func @transform_3(%arg0: i32, %arg1: i32) -> (i32, i32, i32) {
    %c0_i32 = arith.constant 0 : i32
    %c0_i32_0 = arith.constant 0 : i32
    %c0_i32_1 = arith.constant 0 : i32
    return %arg0, %c0_i32, %c0_i32_0 : i32, i32, i32
  }
}

</mosaic_0001>

<llo_original>
// kernel: tpu_custom_call.1
$region0: #{tpu_custom_call.1}
  #allocation0 [shape = 'u32[]', space=smem, size = 0x4, offset = 0x4, fixed_abs, tag = 'smem constant byte address 0x4 - core index']
  #allocation1 [shape = 'u32[72,128]{1,0:T(1,128)}', space=vmem, size = 0x9000, scoped, tag = 'internal scratch']
  %s0 = inlined_call_operand.hbm [shape: f32[1,128], index: 0, kind: input, shape index: {}]
  %s1 = inlined_call_operand.hbm [shape: f32[8,128], index: 1, kind: input, shape index: {}]
  %s2 = inlined_call_operand.hbm [shape: f32[1,1,128], index: 2, kind: output, shape index: {0}]
  %s3 = inlined_call_operand.hbm [shape: f32[1,128,128], index: 3, kind: output, shape index: {1}]
  %4 = xla_tuple %s2, %s3
  %s5 = sld [smem:[#allocation0]]
  $region38: #{tpu_custom_call.1} parent=0
    _
  %s7 = ssub.s32 1, %s5
  %s8 = scalar_select 0, %s7, %s5
  $region1: #{tpu_custom_call.1} parent=0
    #allocation2 [shape = 'u8[512]{0}', space=vmem, size = 0x400, scoped, tag = 'input window, operand 0, single buffered']
    #allocation3 [shape = 's32[1]{0}', space=sflag, size = 0x4, scoped, tag = 'scoped memory for tpu_custom_call.1']
    #allocation4 [shape = 's32[1]{0}', space=sflag, size = 0x4, scoped, tag = 'scoped memory for tpu_custom_call.1']
    #allocation5 [shape = 'u8[4096]{0}', space=vmem, size = 0x1000, scoped, tag = 'input window, operand 1, single buffered']
    #allocation6 [shape = 's32[1]{0}', space=sflag, size = 0x4, scoped, tag = 'scoped memory for tpu_custom_call.1']
    #allocation7 [shape = 'u8[512]{0}', space=vmem, size = 0x400, scoped, tag = 'output window, operand 0, single buffered']
    #allocation8 [shape = 'u8[65536]{0}', space=vmem, size = 0x10000, scoped, tag = 'output window, operand 1, single buffered']
    #allocation9 [shape = 's32[1]{0}', space=sflag, size = 0x4, scoped, tag = 'scoped memory for tpu_custom_call.1']
    %9 = vsyncpa [#allocation3], 0
    %10 = vsyncpa [#allocation6], 0
    %11 = vsyncpa [#allocation4], 0
    %12 = vsyncpa [#allocation9], 0
    // Predicated region
    $region2: #{tpu_custom_call.1} parent=1 // pred_check
      _
    $region3: #{tpu_custom_call.1} parent=1 // pred_check_branch
      %14 = sbr.rel (0) target = $region5
    $region4: #{tpu_custom_call.1} parent=1 // pred_region
      %16 = vsyncadd [#allocation3], 0
      %s18 = sshll.u32 %s0, 4
      %s19 = int_to_ptr.hbm [resolvable:$true] %s18
      %s20 = sshll.u32 [#allocation2], 4
      %s21 = int_to_ptr.vmem [resolvable:$true] %s20
      %23 = dma.hbm_to_vmem [thread:$0]  %s19, 16, %s21, [#allocation3]
    $region5: #{tpu_custom_call.1} parent=1 // pred_fallthru
      _
    // Predicated region
    $region6: #{tpu_custom_call.1} parent=1 // pred_check
      _
    $region7: #{tpu_custom_call.1} parent=1 // pred_check_branch
      %25 = sbr.rel (0) target = $region9
    $region8: #{tpu_custom_call.1} parent=1 // pred_region
      %s26 = sadd.s32 0, 0
      %p27 = scmp.lt.s32.totalorder %s26, 0
      %s28 = scalar_select %p27, %s26, 0
      %30 = vsyncadd [#allocation6], 0
      %s31 = smul.addr %s28, 8
      %s32 = scalar_lea.hbm %s1, %s31
      %s34 = sshll.u32 %s32, 4
      %s35 = int_to_ptr.hbm [resolvable:$true] %s34
      %s36 = sshll.u32 [#allocation5], 4
      %s37 = int_to_ptr.vmem [resolvable:$true] %s36
      %39 = dma.hbm_to_vmem [thread:$0]  %s35, 128, %s37, [#allocation6]
    $region9: #{tpu_custom_call.1} parent=1 // pred_fallthru
      _
    // Predicated region
    $region10: #{tpu_custom_call.1} parent=1 // pred_check
      _
    $region11: #{tpu_custom_call.1} parent=1 // pred_check_branch
      %41 = sbr.rel (0) target = $region13
    $region12: #{tpu_custom_call.1} parent=1 // pred_region
      %43 = dma.done [#allocation3], 16
    $region13: #{tpu_custom_call.1} parent=1 // pred_fallthru
      _
    // Predicated region
    $region14: #{tpu_custom_call.1} parent=1 // pred_check
      _
    $region15: #{tpu_custom_call.1} parent=1 // pred_check_branch
      %45 = sbr.rel (0) target = $region17
    $region16: #{tpu_custom_call.1} parent=1 // pred_region
      %47 = dma.done [#allocation6], 128
    $region17: #{tpu_custom_call.1} parent=1 // pred_fallthru
      _
    %s48 = sadd.s32 0, 0
    %p49 = scmp.lt.s32.totalorder %s48, 0
    %s50 = scalar_select %p49, %s48, 0
    %p51 = scmp.eq.s32.totalorder 0, 0
    // Predicated region
    $region18: #{tpu_custom_call.1} parent=1 // pred_check
      %p52 = pneg %p51
    $region19: #{tpu_custom_call.1} parent=1 // pred_check_branch
      %54 = sbr.rel (%p52) target = $region21
    $region20: #{tpu_custom_call.1} parent=1 // pred_region
      %55 = vst [vmem:[#allocation7] sm:$0x1] 0.0
      %56 = vst [vmem:[#allocation8] sm:$0xff] 0.0
      %57 = vst [vmem:[#allocation8 + $0x8] sm:$0xff] 0.0
      %58 = vst [vmem:[#allocation8 + $0x10] sm:$0xff] 0.0
      %59 = vst [vmem:[#allocation8 + $0x18] sm:$0xff] 0.0
      %60 = vst [vmem:[#allocation8 + $0x20] sm:$0xff] 0.0
      %61 = vst [vmem:[#allocation8 + $0x28] sm:$0xff] 0.0
      %62 = vst [vmem:[#allocation8 + $0x30] sm:$0xff] 0.0
      %63 = vst [vmem:[#allocation8 + $0x38] sm:$0xff] 0.0
      %64 = vst [vmem:[#allocation8 + $0x40] sm:$0xff] 0.0
      %65 = vst [vmem:[#allocation8 + $0x48] sm:$0xff] 0.0
      %66 = vst [vmem:[#allocation8 + $0x50] sm:$0xff] 0.0
      %67 = vst [vmem:[#allocation8 + $0x58] sm:$0xff] 0.0
      %68 = vst [vmem:[#allocation8 + $0x60] sm:$0xff] 0.0
      %69 = vst [vmem:[#allocation8 + $0x68] sm:$0xff] 0.0
      %70 = vst [vmem:[#allocation8 + $0x70] sm:$0xff] 0.0
      %71 = vst [vmem:[#allocation8 + $0x78] sm:$0xff] 0.0
    $region21: #{tpu_custom_call.1} parent=1 // pred_fallthru
      _
    %v72 = vld [vmem:[#allocation5] sm:$0xff]
    %v73 = vld [vmem:[#allocation2] sm:$0x1]
    %v75 = vperm.slane %v73, 0
    %v77 = vsub.f32 %v72, %v75
    %v78 = vld [vmem:[#allocation7] sm:$0x1]
    %v79 = vrot.slane %v77, 4
    %v80 = vadd.f32 %v77, %v79
    %v81 = vrot.slane %v80, 2
    %v82 = vadd.f32 %v80, %v81
    %v83 = vrot.slane %v82, 1
    %v84 = vadd.f32 %v82, %v83
    %v85 = vadd.f32 %v78, %v84
    %86 = vst [vmem:[#allocation7] sm:$0x1] %v85
    %v87 = vld [vmem:[#allocation8] sm:$0xff]
    %v88 = vld [vmem:[#allocation8 + $0x8] sm:$0xff]
    %v89 = vld [vmem:[#allocation8 + $0x10] sm:$0xff]
    %v90 = vld [vmem:[#allocation8 + $0x18] sm:$0xff]
    %v91 = vld [vmem:[#allocation8 + $0x20] sm:$0xff]
    %v92 = vld [vmem:[#allocation8 + $0x28] sm:$0xff]
    %v93 = vld [vmem:[#allocation8 + $0x30] sm:$0xff]
    %v94 = vld [vmem:[#allocation8 + $0x38] sm:$0xff]
    %v95 = vld [vmem:[#allocation8 + $0x40] sm:$0xff]
    %v96 = vld [vmem:[#allocation8 + $0x48] sm:$0xff]
    %v97 = vld [vmem:[#allocation8 + $0x50] sm:$0xff]
    %v98 = vld [vmem:[#allocation8 + $0x58] sm:$0xff]
    %v99 = vld [vmem:[#allocation8 + $0x60] sm:$0xff]
    %v100 = vld [vmem:[#allocation8 + $0x68] sm:$0xff]
    %v101 = vld [vmem:[#allocation8 + $0x70] sm:$0xff]
    %v102 = vld [vmem:[#allocation8 + $0x78] sm:$0xff]
    %103 = vxpose.xlu0.b32.start [1/16] %v77, 128
    %104 = vxpose.xlu0.b32.cont [2/16] 0.0, 128
    %105 = vxpose.xlu0.b32.cont [3/16] 0.0, 128
    %106 = vxpose.xlu0.b32.cont [4/16] 0.0, 128
    %107 = vxpose.xlu0.b32.cont [5/16] 0.0, 128
    %108 = vxpose.xlu0.b32.cont [6/16] 0.0, 128
    %109 = vxpose.xlu0.b32.cont [7/16] 0.0, 128
    %110 = vxpose.xlu0.b32.cont [8/16] 0.0, 128
    %111 = vxpose.xlu0.b32.cont [9/16] 0.0, 128
    %112 = vxpose.xlu0.b32.cont [10/16] 0.0, 128
    %113 = vxpose.xlu0.b32.cont [11/16] 0.0, 128
    %114 = vxpose.xlu0.b32.cont [12/16] 0.0, 128
    %115 = vxpose.xlu0.b32.cont [13/16] 0.0, 128
    %116 = vxpose.xlu0.b32.cont [14/16] 0.0, 128
    %117 = vxpose.xlu0.b32.cont [15/16] 0.0, 128
    %118 = vxpose.xlu0.b32.end [16/16] 0.0, 128
    %v119 = vpop.trf.xlu0
    %v120 = vpop.trf.xlu0
    %v121 = vpop.trf.xlu0
    %v122 = vpop.trf.xlu0
    %v123 = vpop.trf.xlu0
    %v124 = vpop.trf.xlu0
    %v125 = vpop.trf.xlu0
    %v126 = vpop.trf.xlu0
    %v127 = vpop.trf.xlu0
    %v128 = vpop.trf.xlu0
    %v129 = vpop.trf.xlu0
    %v130 = vpop.trf.xlu0
    %v131 = vpop.trf.xlu0
    %v132 = vpop.trf.xlu0
    %v133 = vpop.trf.xlu0
    %v134 = vpop.trf.xlu0
    %vm135 = vcmask 64512
    %v137 = vsel %vm135, %v119, 0
    %v140 = vsel %vm135, %v120, 0
    %v143 = vsel %vm135, %v121, 0
    %v146 = vsel %vm135, %v122, 0
    %v149 = vsel %vm135, %v123, 0
    %v152 = vsel %vm135, %v124, 0
    %v155 = vsel %vm135, %v125, 0
    %v158 = vsel %vm135, %v126, 0
    %v161 = vsel %vm135, %v127, 0
    %v164 = vsel %vm135, %v128, 0
    %v167 = vsel %vm135, %v129, 0
    %v170 = vsel %vm135, %v130, 0
    %v173 = vsel %vm135, %v131, 0
    %v176 = vsel %vm135, %v132, 0
    %v179 = vsel %vm135, %v133, 0
    %v182 = vsel %vm135, %v134, 0
    %184 = vmatpush.msra.mxu0 0.0
    %185 = vmatpush.msra.mxu0 0.0
    %186 = vmatpush.msra.mxu0 0.0
    %187 = vmatpush.msra.mxu0 0.0
    %188 = vmatpush.msra.mxu0 0.0
    %189 = vmatpush.msra.mxu0 0.0
    %190 = vmatpush.msra.mxu0 0.0
    %191 = vmatpush.msra.mxu0 0.0
    %192 = vmatpush.msra.mxu0 0.0
    %193 = vmatpush.msra.mxu0 0.0
    %194 = vmatpush.msra.mxu0 0.0
    %195 = vmatpush.msra.mxu0 0.0
    %196 = vmatpush.msra.mxu0 0.0
    %197 = vmatpush.msra.mxu0 0.0
    %198 = vmatpush.msra.mxu0 0.0
    %199 = vmatpush.msra.mxu0 %v77
    %200 = vmatmul.f32.gmra.mxu0 %v137
    %v201 = vpop.f32.mrf.mxu0
    %v202 = vadd.f32 0.0, %v201
    %203 = vmatmul.f32.gmra.mxu0 %v140
    %v204 = vpop.f32.mrf.mxu0
    %v205 = vadd.f32 0.0, %v204
    %206 = vmatmul.f32.gmra.mxu0 %v143
    %v207 = vpop.f32.mrf.mxu0
    %v208 = vadd.f32 0.0, %v207
    %209 = vmatmul.f32.gmra.mxu0 %v146
    %v210 = vpop.f32.mrf.mxu0
    %v211 = vadd.f32 0.0, %v210
    %212 = vmatmul.f32.gmra.mxu0 %v149
    %v213 = vpop.f32.mrf.mxu0
    %v214 = vadd.f32 0.0, %v213
    %215 = vmatmul.f32.gmra.mxu0 %v152
    %v216 = vpop.f32.mrf.mxu0
    %v217 = vadd.f32 0.0, %v216
    %218 = vmatmul.f32.gmra.mxu0 %v155
    %v219 = vpop.f32.mrf.mxu0
    %v220 = vadd.f32 0.0, %v219
    %221 = vmatmul.f32.gmra.mxu0 %v158
    %v222 = vpop.f32.mrf.mxu0
    %v223 = vadd.f32 0.0, %v222
    %224 = vmatmul.f32.gmra.mxu0 %v161
    %v225 = vpop.f32.mrf.mxu0
    %v226 = vadd.f32 0.0, %v225
    %227 = vmatmul.f32.gmra.mxu0 %v164
    %v228 = vpop.f32.mrf.mxu0
    %v229 = vadd.f32 0.0, %v228
    %230 = vmatmul.f32.gmra.mxu0 %v167
    %v231 = vpop.f32.mrf.mxu0
    %v232 = vadd.f32 0.0, %v231
    %233 = vmatmul.f32.gmra.mxu0 %v170
    %v234 = vpop.f32.mrf.mxu0
    %v235 = vadd.f32 0.0, %v234
    %236 = vmatmul.f32.gmra.mxu0 %v173
    %v237 = vpop.f32.mrf.mxu0
    %v238 = vadd.f32 0.0, %v237
    %239 = vmatmul.f32.gmra.mxu0 %v176
    %v240 = vpop.f32.mrf.mxu0
    %v241 = vadd.f32 0.0, %v240
    %242 = vmatmul.f32.gmra.mxu0 %v179
    %v243 = vpop.f32.mrf.mxu0
    %v244 = vadd.f32 0.0, %v243
    %245 = vmatmul.f32.gmra.mxu0 %v182
    %v246 = vpop.f32.mrf.mxu0
    %v247 = vadd.f32 0.0, %v246
    %248 = vdwg.mxu0
    %v249 = vadd.f32 %v87, %v202
    %v250 = vadd.f32 %v88, %v205
    %v251 = vadd.f32 %v89, %v208
    %v252 = vadd.f32 %v90, %v211
    %v253 = vadd.f32 %v91, %v214
    %v254 = vadd.f32 %v92, %v217
    %v255 = vadd.f32 %v93, %v220
    %v256 = vadd.f32 %v94, %v223
    %v257 = vadd.f32 %v95, %v226
    %v258 = vadd.f32 %v96, %v229
    %v259 = vadd.f32 %v97, %v232
    %v260 = vadd.f32 %v98, %v235
    %v261 = vadd.f32 %v99, %v238
    %v262 = vadd.f32 %v100, %v241
    %v263 = vadd.f32 %v101, %v244
    %v264 = vadd.f32 %v102, %v247
    %265 = vst [vmem:[#allocation8] sm:$0xff] %v249
    %266 = vst [vmem:[#allocation8 + $0x8] sm:$0xff] %v250
    %267 = vst [vmem:[#allocation8 + $0x10] sm:$0xff] %v251
    %268 = vst [vmem:[#allocation8 + $0x18] sm:$0xff] %v252
    %269 = vst [vmem:[#allocation8 + $0x20] sm:$0xff] %v253
    %270 = vst [vmem:[#allocation8 + $0x28] sm:$0xff] %v254
    %271 = vst [vmem:[#allocation8 + $0x30] sm:$0xff] %v255
    %272 = vst [vmem:[#allocation8 + $0x38] sm:$0xff] %v256
    %273 = vst [vmem:[#allocation8 + $0x40] sm:$0xff] %v257
    %274 = vst [vmem:[#allocation8 + $0x48] sm:$0xff] %v258
    %275 = vst [vmem:[#allocation8 + $0x50] sm:$0xff] %v259
    %276 = vst [vmem:[#allocation8 + $0x58] sm:$0xff] %v260
    %277 = vst [vmem:[#allocation8 + $0x60] sm:$0xff] %v261
    %278 = vst [vmem:[#allocation8 + $0x68] sm:$0xff] %v262
    %279 = vst [vmem:[#allocation8 + $0x70] sm:$0xff] %v263
    %280 = vst [vmem:[#allocation8 + $0x78] sm:$0xff] %v264
    // Predicated region
    $region22: #{tpu_custom_call.1} parent=1 // pred_check
      _
    $region23: #{tpu_custom_call.1} parent=1 // pred_check_branch
      %282 = sbr.rel (0) target = $region25
    $region24: #{tpu_custom_call.1} parent=1 // pred_region
      %284 = vsyncadd [#allocation4], 0
      %s286 = sshll.u32 [#allocation7], 4
      %s287 = int_to_ptr.vmem [resolvable:$true] %s286
      %s288 = sshll.u32 %s2, 4
      %s289 = int_to_ptr.hbm [resolvable:$true] %s288
      %291 = dma.vmem_to_hbm [thread:$0]  %s287, 16, %s289, [#allocation4]
    $region25: #{tpu_custom_call.1} parent=1 // pred_fallthru
      _
    // Predicated region
    $region26: #{tpu_custom_call.1} parent=1 // pred_check
      _
    $region27: #{tpu_custom_call.1} parent=1 // pred_check_branch
      %293 = sbr.rel (0) target = $region29
    $region28: #{tpu_custom_call.1} parent=1 // pred_region
      %295 = vsyncadd [#allocation9], 0
      %s296 = sshll.u32 [#allocation8], 4
      %s297 = int_to_ptr.vmem [resolvable:$true] %s296
      %s298 = sshll.u32 %s3, 4
      %s299 = int_to_ptr.hbm [resolvable:$true] %s298
      %304 = dma.vmem_to_hbm [thread:$0]  %s297, 2048, %s299, [#allocation9], 128, 128, 8
    $region29: #{tpu_custom_call.1} parent=1 // pred_fallthru
      _
    // Predicated region
    $region30: #{tpu_custom_call.1} parent=1 // pred_check
      _
    $region31: #{tpu_custom_call.1} parent=1 // pred_check_branch
      %306 = sbr.rel (0) target = $region33
    $region32: #{tpu_custom_call.1} parent=1 // pred_region
      %308 = dma.done [#allocation4], 16
    $region33: #{tpu_custom_call.1} parent=1 // pred_fallthru
      _
    // Predicated region
    $region34: #{tpu_custom_call.1} parent=1 // pred_check
      _
    $region35: #{tpu_custom_call.1} parent=1 // pred_check_branch
      %310 = sbr.rel (0) target = $region37
    $region36: #{tpu_custom_call.1} parent=1 // pred_region
      %312 = dma.done [#allocation9], 2048
    $region37: #{tpu_custom_call.1} parent=1 // pred_fallthru
      _
    %313 = vsyncpa [#allocation3], 1
    %314 = vsyncpa [#allocation6], 1
    %315 = vsyncpa [#allocation4], 1
    %316 = vsyncpa [#allocation9], 1

</llo_original>
